<compile_context>
chip_gen: v5e
topology: v5e:2x2
jax: 0.10.0
libtpu: 0.0.40
codegen_flags: <defaults>
</compile_context>

<pallas_src>
import math
import functools

import numpy as np
import jax
import jax.numpy as jnp
from jax.experimental import pallas as pl
from jax.experimental.pallas import tpu as pltpu


def _cross_attention_kernel(xq_ref, xk_ref,
                            wq_ref, bq_ref,
                            wk_ref, bk_ref,
                            wv_ref, bv_ref,
                            *rest,
                            num_heads, head_dim, mxu_dtype):
    # Optional mask operand: rest is (mask_ref, out_ref) or (out_ref,).
    if len(rest) == 2:
        mask_ref, out_ref = rest
    else:
        mask_ref = None
        (out_ref,) = rest

    H, d = num_heads, head_dim
    Bt, Lq, Dq = xq_ref.shape
    _, Lk, Dk = xk_ref.shape

    # ---- Wide Q/K/V projections: one MXU matmul per input, M = Bt*L. --------
    xq = xq_ref[...].reshape(Bt * Lq, Dq).astype(mxu_dtype)
    xk = xk_ref[...].reshape(Bt * Lk, Dk).astype(mxu_dtype)

    # 1/sqrt(d) is already folded into Wq / bq.
    q = jnp.dot(xq, wq_ref[...], preferred_element_type=jnp.float32) + bq_ref[...]  # (Bt*Lq, H*d)
    k = jnp.dot(xk, wk_ref[...], preferred_element_type=jnp.float32) + bk_ref[...]  # (Bt*Lk, H*d)
    v = jnp.dot(xk, wv_ref[...], preferred_element_type=jnp.float32) + bv_ref[...]  # (Bt*Lk, H*d)

    # ---- Split heads once onto a leading batch axis: (H*Bt, L, d). ----------
    def split_heads(t, L):
        heads = [t[:, h * d:(h + 1) * d] for h in range(H)]       # H x (Bt*L, d)
        return jnp.stack(heads, axis=0).reshape(H * Bt, L, d)     # leading-dim reshapes only

    qs = split_heads(q, Lq).astype(mxu_dtype)
    ks = split_heads(k, Lk).astype(mxu_dtype)
    vs = split_heads(v, Lk).astype(mxu_dtype)

    # ---- Scores: single head/batch-batched dot_general (contract over d). ---
    scores = jnp.einsum('zqd,zkd->zqk', qs, ks,
                        preferred_element_type=jnp.float32)        # (H*Bt, Lq, Lk) f32

    # ---- Additive mask, computed once in-kernel from the raw int8 mask. -----
    if mask_ref is not None:
        add_mask = (1.0 - mask_ref[...].astype(jnp.float32)) * (-10000.0)   # (Bt, Lq, Lk)
        scores = (scores.reshape(H, Bt, Lq, Lk) + add_mask[None]
                  ).reshape(H * Bt, Lq, Lk)

    # ---- Numerically stable softmax over keys, all in f32 (VPU/EUP). --------
    s_max = jnp.max(scores, axis=-1, keepdims=True)
    e = jnp.exp(scores - s_max)
    denom = jnp.sum(e, axis=-1, keepdims=True)
    probs = e / denom   # exact; swap for pl.reciprocal(denom, approx=True) if EUP slack matters

    # ---- Context: one batched dot_general, then lane-dense per-head stores. -
    ctx = jnp.einsum('zqk,zkd->zqd', probs.astype(mxu_dtype), vs,
                     preferred_element_type=jnp.float32)            # (H*Bt, Lq, d)
    ctx = ctx.reshape(H, Bt, Lq, d)
    for h in range(H):  # static small loop; each head's result is stored and freed
        out_ref[:, :, h * d:(h + 1) * d] = ctx[h].astype(out_ref.dtype)


def cross_attention(hidden_states_query, hidden_states_key, attention_mask,
                    wq, bq, wk, bk, wv, bv, num_heads, head_dim,
                    *, mxu_dtype=jnp.bfloat16, batch_block=None):
    """Pallas implementation of CrossAttention.forward (return_scores=False)."""
    B, Lq, Dq = hidden_states_query.shape
    Bk, Lk, Dk = hidden_states_key.shape
    assert Bk == B
    H, d = num_heads, head_dim
    HD = H * d
    assert wq.shape == (HD, Dq) and bq.shape == (HD,)
    assert wk.shape == (HD, Dk) and wv.shape == (HD, Dk)

    # Batch-block size: big enough that Bt*Lq gives the projections a real MXU
    # M dimension.  (On v7x, if B allows, prefer >= 2 grid steps so both
    # TensorCores get work; at large B this holds automatically.)
    if batch_block is None:
        bt = max(1, min(B, 512 // max(Lq, 1)))
        while B % bt:
            bt -= 1
    else:
        bt = batch_block
        assert B % bt == 0
    grid = (B // bt,)

    # Pre-transposed (D_in, H*d) weights in the MXU dtype; fold 1/sqrt(d) into Wq/bq.
    scale = 1.0 / math.sqrt(d)
    wq_t = (wq * scale).T.astype(mxu_dtype)
    wk_t = wk.T.astype(mxu_dtype)
    wv_t = wv.T.astype(mxu_dtype)
    bq_s = (bq * scale).reshape(1, HD).astype(jnp.float32)
    bk_2 = bk.reshape(1, HD).astype(jnp.float32)
    bv_2 = bv.reshape(1, HD).astype(jnp.float32)

    has_mask = attention_mask is not None

    in_specs = [
        pl.BlockSpec((bt, Lq, Dq), lambda g: (g, 0, 0)),   # x_query
        pl.BlockSpec((bt, Lk, Dk), lambda g: (g, 0, 0)),   # x_key
        pl.BlockSpec((Dq, HD), lambda g: (0, 0)),          # Wq^T (scaled)
        pl.BlockSpec((1, HD), lambda g: (0, 0)),           # bq (scaled)
        pl.BlockSpec((Dk, HD), lambda g: (0, 0)),          # Wk^T
        pl.BlockSpec((1, HD), lambda g: (0, 0)),           # bk
        pl.BlockSpec((Dk, HD), lambda g: (0, 0)),          # Wv^T
        pl.BlockSpec((1, HD), lambda g: (0, 0)),           # bv
    ]
    args = [hidden_states_query.astype(jnp.float32),
            hidden_states_key.astype(jnp.float32),
            wq_t, bq_s, wk_t, bk_2, wv_t, bv_2]
    if has_mask:
        # Raw 0/1 mask as int8 (4x less DMA than a precomputed f32 additive mask).
        in_specs.append(pl.BlockSpec((bt, Lq, Lk), lambda g: (g, 0, 0)))
        args.append(attention_mask.astype(jnp.int8))

    # Rough VMEM budget: double-buffered blocks + resident intermediates.
    itm = np.dtype(mxu_dtype).itemsize
    blk_bytes = (bt * Lq * Dq * 4 + bt * Lk * Dk * 4 + bt * Lq * HD * 4
                 + (Dq + 2 * Dk) * HD * itm + 3 * HD * 4
                 + (bt * Lq * Lk if has_mask else 0))
    interm_bytes = (4 * bt * H * Lq * Lk * 4                       # scores / exp / probs (f32)
                    + 2 * (bt * Lq + 2 * bt * Lk) * HD * (4 + itm))  # q/k/v + head-stacked copies
    vmem_limit = int(min(max(2 * blk_bytes + interm_bytes + (4 << 20), 16 << 20),
                         64 << 20))

    kernel = functools.partial(_cross_attention_kernel,
                               num_heads=H, head_dim=d, mxu_dtype=mxu_dtype)

    out = pl.pallas_call(
        kernel,
        out_shape=jax.ShapeDtypeStruct((B, Lq, HD), jnp.float32),
        grid_spec=pltpu.PrefetchScalarGridSpec(
            num_scalar_prefetch=0,
            grid=grid,
            in_specs=in_specs,
            out_specs=pl.BlockSpec((bt, Lq, HD), lambda g: (g, 0, 0)),
        ),
        compiler_params=pltpu.CompilerParams(
            dimension_semantics=("parallel",),
            vmem_limit_bytes=vmem_limit),
    )(*args)

    # Already lane-dense in (B, Lq, H*d) — the PyTorch permute + view is free here.
    return out


def _reference(xq, xk, mask, wq, bq, wk, bk, wv, bv, H, d):
    """Pure-JAX reference mirroring the PyTorch CrossAttention.forward."""
    B, Lq, _ = xq.shape
    _, Lk, _ = xk.shape
    q = (xq @ wq.T + bq).reshape(B, Lq, H, d).transpose(0, 2, 1, 3)
    k = (xk @ wk.T + bk).reshape(B, Lk, H, d).transpose(0, 2, 1, 3)
    v = (xk @ wv.T + bv).reshape(B, Lk, H, d).transpose(0, 2, 1, 3)
    scores = jnp.einsum("bhqd,bhkd->bhqk", q / math.sqrt(d), k)
    if mask is not None:
        scores = scores + (1.0 - mask[:, None, :, :]) * (-10000.0)
    probs = jax.nn.softmax(scores, axis=-1)
    ctx = jnp.einsum("bhqk,bhkd->bhqd", probs, v)
    return ctx.transpose(0, 2, 1, 3).reshape(B, Lq, H * d)


if __name__ == "__main__":
    # Small configuration consistent with CrossAttention.__init__:
    #   hidden_size=32, num_attention_heads=2 -> head_dim=16, all_head_size=32
    #   query_hidden_size=16, key_hidden_size=24
    hidden_size = 32
    num_heads = 2
    head_dim = hidden_size // num_heads
    all_head = num_heads * head_dim
    query_hidden_size = 16
    key_hidden_size = 24
    B, Lq, Lk = 2, 8, 16

    key = jax.random.PRNGKey(0)
    keys = jax.random.split(key, 10)

    def linear_init(kw, kb, out_f, in_f):
        # Deterministic init mimicking nn.Linear's uniform(-1/sqrt(in), 1/sqrt(in)).
        bound = 1.0 / math.sqrt(in_f)
        w = jax.random.uniform(kw, (out_f, in_f), jnp.float32, -bound, bound)
        b = jax.random.uniform(kb, (out_f,), jnp.float32, -bound, bound)
        return w, b

    wq, bq = linear_init(keys[0], keys[1], all_head, query_hidden_size)
    wk, bk = linear_init(keys[2], keys[3], all_head, key_hidden_size)
    wv, bv = linear_init(keys[4], keys[5], all_head, key_hidden_size)

    xq = jax.random.normal(keys[6], (B, Lq, query_hidden_size), jnp.float32)
    xk = jax.random.normal(keys[7], (B, Lk, key_hidden_size), jnp.float32)
    # Random 0/1 attention mask (1 = attend); keep at least one valid key per query.
    mask = (jax.random.uniform(keys[8], (B, Lq, Lk)) > 0.3).astype(jnp.float32)
    mask = mask.at[:, :, 0].set(1.0)

    ref = _reference(xq, xk, mask, wq, bq, wk, bk, wv, bv, num_heads, head_dim)

    # Default (bf16 MXU operands, f32 accumulation / softmax).
    out_bf16 = jax.block_until_ready(
        cross_attention(xq, xk, mask, wq, bq, wk, bk, wv, bv, num_heads, head_dim))
    assert out_bf16.shape == (B, Lq, all_head)
    assert jnp.allclose(out_bf16, ref, atol=5e-2, rtol=5e-2), (
        float(jnp.max(jnp.abs(out_bf16 - ref))))

    # Exact f32 path — tight check against the reference.
    out_f32 = jax.block_until_ready(
        cross_attention(xq, xk, mask, wq, bq, wk, bk, wv, bv, num_heads, head_dim,
                        mxu_dtype=jnp.float32))
    assert jnp.allclose(out_f32, ref, atol=2e-4, rtol=2e-4), (
        float(jnp.max(jnp.abs(out_f32 - ref))))

    # No-mask variant (mask operand is skipped entirely, no zero-tensor DMA).
    ref_nm = _reference(xq, xk, None, wq, bq, wk, bk, wv, bv, num_heads, head_dim)
    out_nm = jax.block_until_ready(
        cross_attention(xq, xk, None, wq, bq, wk, bk, wv, bv, num_heads, head_dim))
    assert jnp.allclose(out_nm, ref_nm, atol=5e-2, rtol=5e-2), (
        float(jnp.max(jnp.abs(out_nm - ref_nm))))

    print("KERNEL_OK")
</pallas_src>

<mosaic_0001>
module attributes {stable_mosaic.version = 11 : i64} {
  func.func @_cross_attention_kernel(%arg0: i32, %arg1: memref<2x8x16xf32, #tpu.memory_space<vmem>>, %arg2: memref<2x16x24xf32, #tpu.memory_space<vmem>>, %arg3: memref<16x32xbf16, #tpu.memory_space<vmem>>, %arg4: memref<1x32xf32, #tpu.memory_space<vmem>>, %arg5: memref<24x32xbf16, #tpu.memory_space<vmem>>, %arg6: memref<1x32xf32, #tpu.memory_space<vmem>>, %arg7: memref<24x32xbf16, #tpu.memory_space<vmem>>, %arg8: memref<1x32xf32, #tpu.memory_space<vmem>>, %arg9: memref<2x8x16xi8, #tpu.memory_space<vmem>>, %arg10: memref<2x8x32xf32, #tpu.memory_space<vmem>>) attributes {dimension_semantics = [#tpu.dimension_semantics<parallel>], iteration_bounds = array<i64: 1>, scalar_prefetch = 0 : i64, scratch_operands = 0 : i64, tpu.core_type = #tpu.core_type<tc>, window_params = [{transform_indices = @transform_0, window_bounds = array<i64: 2, 8, 16>}, {transform_indices = @transform_1, window_bounds = array<i64: 2, 16, 24>}, {pipeline_mode = #tpu.pipeline_mode<synchronous>, transform_indices = @transform_2, window_bounds = array<i64: 16, 32>}, {pipeline_mode = #tpu.pipeline_mode<synchronous>, transform_indices = @transform_3, window_bounds = array<i64: 1, 32>}, {pipeline_mode = #tpu.pipeline_mode<synchronous>, transform_indices = @transform_4, window_bounds = array<i64: 24, 32>}, {pipeline_mode = #tpu.pipeline_mode<synchronous>, transform_indices = @transform_5, window_bounds = array<i64: 1, 32>}, {pipeline_mode = #tpu.pipeline_mode<synchronous>, transform_indices = @transform_6, window_bounds = array<i64: 24, 32>}, {pipeline_mode = #tpu.pipeline_mode<synchronous>, transform_indices = @transform_7, window_bounds = array<i64: 1, 32>}, {transform_indices = @transform_8, window_bounds = array<i64: 2, 8, 16>}, {transform_indices = @transform_9, window_bounds = array<i64: 2, 8, 32>}]} {
    %c0 = arith.constant 0 : index
    %c0_0 = arith.constant 0 : index
    %c0_1 = arith.constant 0 : index
    %0 = vector.load %arg1[%c0, %c0_0, %c0_1] : memref<2x8x16xf32, #tpu.memory_space<vmem>>, vector<2x8x16xf32>
    %1 = vector.shape_cast %0 : vector<2x8x16xf32> to vector<16x16xf32>
    %2 = arith.truncf %1 : vector<16x16xf32> to vector<16x16xbf16>
    %c0_2 = arith.constant 0 : index
    %c0_3 = arith.constant 0 : index
    %c0_4 = arith.constant 0 : index
    %3 = vector.load %arg2[%c0_2, %c0_3, %c0_4] : memref<2x16x24xf32, #tpu.memory_space<vmem>>, vector<2x16x24xf32>
    %4 = vector.shape_cast %3 : vector<2x16x24xf32> to vector<32x24xf32>
    %5 = arith.truncf %4 : vector<32x24xf32> to vector<32x24xbf16>
    %c0_5 = arith.constant 0 : index
    %c0_6 = arith.constant 0 : index
    %6 = vector.load %arg3[%c0_5, %c0_6] : memref<16x32xbf16, #tpu.memory_space<vmem>>, vector<16x32xbf16>
    %cst = arith.constant dense<0.000000e+00> : vector<16x32xf32>
    %7 = tpu.matmul %2, %6, %cst {dimension_numbers = #tpu.dot_dimension_numbers<[1], [0], [0], [1], [0, 0, 1, 1], [], []>} : vector<16x16xbf16>, vector<16x32xbf16>, vector<16x32xf32> -> vector<16x32xf32>
    %c0_7 = arith.constant 0 : index
    %c0_8 = arith.constant 0 : index
    %8 = vector.load %arg4[%c0_7, %c0_8] : memref<1x32xf32, #tpu.memory_space<vmem>>, vector<1x32xf32>
    %9 = vector.broadcast %8 : vector<1x32xf32> to vector<16x32xf32>
    %10 = arith.addf %7, %9 : vector<16x32xf32>
    %c0_9 = arith.constant 0 : index
    %c0_10 = arith.constant 0 : index
    %11 = vector.load %arg5[%c0_9, %c0_10] : memref<24x32xbf16, #tpu.memory_space<vmem>>, vector<24x32xbf16>
    %cst_11 = arith.constant dense<0.000000e+00> : vector<32x32xf32>
    %12 = tpu.matmul %5, %11, %cst_11 {dimension_numbers = #tpu.dot_dimension_numbers<[1], [0], [0], [1], [0, 0, 1, 1], [], []>} : vector<32x24xbf16>, vector<24x32xbf16>, vector<32x32xf32> -> vector<32x32xf32>
    %c0_12 = arith.constant 0 : index
    %c0_13 = arith.constant 0 : index
    %13 = vector.load %arg6[%c0_12, %c0_13] : memref<1x32xf32, #tpu.memory_space<vmem>>, vector<1x32xf32>
    %14 = vector.broadcast %13 : vector<1x32xf32> to vector<32x32xf32>
    %15 = arith.addf %12, %14 : vector<32x32xf32>
    %c0_14 = arith.constant 0 : index
    %c0_15 = arith.constant 0 : index
    %16 = vector.load %arg7[%c0_14, %c0_15] : memref<24x32xbf16, #tpu.memory_space<vmem>>, vector<24x32xbf16>
    %cst_16 = arith.constant dense<0.000000e+00> : vector<32x32xf32>
    %17 = tpu.matmul %5, %16, %cst_16 {dimension_numbers = #tpu.dot_dimension_numbers<[1], [0], [0], [1], [0, 0, 1, 1], [], []>} : vector<32x24xbf16>, vector<24x32xbf16>, vector<32x32xf32> -> vector<32x32xf32>
    %c0_17 = arith.constant 0 : index
    %c0_18 = arith.constant 0 : index
    %18 = vector.load %arg8[%c0_17, %c0_18] : memref<1x32xf32, #tpu.memory_space<vmem>>, vector<1x32xf32>
    %19 = vector.broadcast %18 : vector<1x32xf32> to vector<32x32xf32>
    %20 = arith.addf %17, %19 : vector<32x32xf32>
    %21 = vector.extract_strided_slice %10 {offsets = [0, 0], sizes = [16, 16], strides = [1, 1]} : vector<16x32xf32> to vector<16x16xf32>
    %22 = vector.extract_strided_slice %10 {offsets = [0, 16], sizes = [16, 16], strides = [1, 1]} : vector<16x32xf32> to vector<16x16xf32>
    %23 = vector.shape_cast %21 : vector<16x16xf32> to vector<1x16x16xf32>
    %24 = vector.shape_cast %22 : vector<16x16xf32> to vector<1x16x16xf32>
    %25 = tpu.concatenate %23, %24 in 0 : vector<1x16x16xf32>, vector<1x16x16xf32> -> vector<2x16x16xf32>
    %26 = vector.shape_cast %25 : vector<2x16x16xf32> to vector<4x8x16xf32>
    %27 = arith.truncf %26 : vector<4x8x16xf32> to vector<4x8x16xbf16>
    %28 = vector.extract_strided_slice %15 {offsets = [0, 0], sizes = [32, 16], strides = [1, 1]} : vector<32x32xf32> to vector<32x16xf32>
    %29 = vector.extract_strided_slice %15 {offsets = [0, 16], sizes = [32, 16], strides = [1, 1]} : vector<32x32xf32> to vector<32x16xf32>
    %30 = vector.shape_cast %28 : vector<32x16xf32> to vector<1x32x16xf32>
    %31 = vector.shape_cast %29 : vector<32x16xf32> to vector<1x32x16xf32>
    %32 = tpu.concatenate %30, %31 in 0 : vector<1x32x16xf32>, vector<1x32x16xf32> -> vector<2x32x16xf32>
    %33 = vector.shape_cast %32 : vector<2x32x16xf32> to vector<4x16x16xf32>
    %34 = arith.truncf %33 : vector<4x16x16xf32> to vector<4x16x16xbf16>
    %35 = vector.extract_strided_slice %20 {offsets = [0, 0], sizes = [32, 16], strides = [1, 1]} : vector<32x32xf32> to vector<32x16xf32>
    %36 = vector.extract_strided_slice %20 {offsets = [0, 16], sizes = [32, 16], strides = [1, 1]} : vector<32x32xf32> to vector<32x16xf32>
    %37 = vector.shape_cast %35 : vector<32x16xf32> to vector<1x32x16xf32>
    %38 = vector.shape_cast %36 : vector<32x16xf32> to vector<1x32x16xf32>
    %39 = tpu.concatenate %37, %38 in 0 : vector<1x32x16xf32>, vector<1x32x16xf32> -> vector<2x32x16xf32>
    %40 = vector.shape_cast %39 : vector<2x32x16xf32> to vector<4x16x16xf32>
    %41 = arith.truncf %40 : vector<4x16x16xf32> to vector<4x16x16xbf16>
    "tpu.trace_start"() <{level = 10 : i32, message = "zqd,zkd->zqk"}> : () -> ()
    %cst_19 = arith.constant dense<0.000000e+00> : vector<4x8x16xf32>
    %42 = tpu.matmul %27, %34, %cst_19 {dimension_numbers = #tpu.dot_dimension_numbers<[2], [2], [1], [1], [0, 0, 0, 1, 1, 1], [0], [0]>} : vector<4x8x16xbf16>, vector<4x16x16xbf16>, vector<4x8x16xf32> -> vector<4x8x16xf32>
    "tpu.trace_stop"() : () -> ()
    %c0_20 = arith.constant 0 : index
    %c0_21 = arith.constant 0 : index
    %c0_22 = arith.constant 0 : index
    %43 = vector.load %arg9[%c0_20, %c0_21, %c0_22] : memref<2x8x16xi8, #tpu.memory_space<vmem>>, vector<2x8x16xi8>
    %44 = arith.sitofp %43 : vector<2x8x16xi8> to vector<2x8x16xf32>
    %cst_23 = arith.constant 1.000000e+00 : f32
    %45 = vector.broadcast %cst_23 : f32 to vector<2x8x16xf32>
    %46 = arith.subf %45, %44 : vector<2x8x16xf32>
    %cst_24 = arith.constant -1.000000e+04 : f32
    %47 = vector.broadcast %cst_24 : f32 to vector<2x8x16xf32>
    %48 = arith.mulf %46, %47 : vector<2x8x16xf32>
    %49 = vector.shape_cast %42 : vector<4x8x16xf32> to vector<2x2x8x16xf32>
    %50 = vector.shape_cast %48 : vector<2x8x16xf32> to vector<1x2x8x16xf32>
    %51 = vector.broadcast %50 : vector<1x2x8x16xf32> to vector<2x2x8x16xf32>
    %52 = arith.addf %49, %51 : vector<2x2x8x16xf32>
    %53 = vector.shape_cast %52 : vector<2x2x8x16xf32> to vector<4x8x16xf32>
    %cst_25 = arith.constant dense<0xFF800000> : vector<4x8xf32>
    %54 = vector.multi_reduction <maximumf>, %53, %cst_25 [2] : vector<4x8x16xf32> to vector<4x8xf32>
    %55 = vector.shape_cast %54 : vector<4x8xf32> to vector<4x8x1xf32>
    %56 = vector.broadcast %55 : vector<4x8x1xf32> to vector<4x8x16xf32>
    %57 = arith.subf %53, %56 : vector<4x8x16xf32>
    %58 = math.exp %57 : vector<4x8x16xf32>
    %cst_26 = arith.constant dense<0.000000e+00> : vector<4x8xf32>
    %59 = vector.multi_reduction <add>, %58, %cst_26 [2] : vector<4x8x16xf32> to vector<4x8xf32>
    %60 = vector.shape_cast %59 : vector<4x8xf32> to vector<4x8x1xf32>
    %61 = vector.broadcast %60 : vector<4x8x1xf32> to vector<4x8x16xf32>
    %62 = arith.divf %58, %61 : vector<4x8x16xf32>
    %63 = arith.truncf %62 : vector<4x8x16xf32> to vector<4x8x16xbf16>
    "tpu.trace_start"() <{level = 10 : i32, message = "zqk,zkd->zqd"}> : () -> ()
    %cst_27 = arith.constant dense<0.000000e+00> : vector<4x8x16xf32>
    %64 = tpu.matmul %63, %41, %cst_27 {dimension_numbers = #tpu.dot_dimension_numbers<[2], [1], [1], [2], [0, 0, 0, 1, 1, 2], [0], [0]>} : vector<4x8x16xbf16>, vector<4x16x16xbf16>, vector<4x8x16xf32> -> vector<4x8x16xf32>
    "tpu.trace_stop"() : () -> ()
    %65 = vector.shape_cast %64 : vector<4x8x16xf32> to vector<2x2x8x16xf32>
    %66 = vector.extract_strided_slice %65 {offsets = [0, 0, 0, 0], sizes = [1, 2, 8, 16], strides = [1, 1, 1, 1]} : vector<2x2x8x16xf32> to vector<1x2x8x16xf32>
    %67 = vector.shape_cast %66 : vector<1x2x8x16xf32> to vector<2x8x16xf32>
    %c0_28 = arith.constant 0 : index
    %c0_29 = arith.constant 0 : index
    %c0_30 = arith.constant 0 : index
    %68 = vector.load %arg10[%c0_28, %c0_29, %c0_30] : memref<2x8x32xf32, #tpu.memory_space<vmem>>, vector<2x8x16xf32>
    tpu.vector_store %arg10[%c0_28, %c0_29, %c0_30], %67 {strides = array<i32>} : memref<2x8x32xf32, #tpu.memory_space<vmem>>, vector<2x8x16xf32>,
    %69 = vector.extract_strided_slice %65 {offsets = [1, 0, 0, 0], sizes = [1, 2, 8, 16], strides = [1, 1, 1, 1]} : vector<2x2x8x16xf32> to vector<1x2x8x16xf32>
    %70 = vector.shape_cast %69 : vector<1x2x8x16xf32> to vector<2x8x16xf32>
    %c0_31 = arith.constant 0 : index
    %c0_32 = arith.constant 0 : index
    %c16 = arith.constant 16 : index
    %71 = vector.load %arg10[%c0_31, %c0_32, %c16] : memref<2x8x32xf32, #tpu.memory_space<vmem>>, vector<2x8x16xf32>
    tpu.vector_store %arg10[%c0_31, %c0_32, %c16], %70 {strides = array<i32>} : memref<2x8x32xf32, #tpu.memory_space<vmem>>, vector<2x8x16xf32>,
    return
  }
  func.func @transform_0(%arg0: i32) -> (i32, i32, i32) {
    %c0_i32 = arith.constant 0 : i32
    %c0_i32_0 = arith.constant 0 : i32
    %c0_i32_1 = arith.constant 0 : i32
    return %arg0, %c0_i32, %c0_i32_0 : i32, i32, i32
  }
  func.func @transform_1(%arg0: i32) -> (i32, i32, i32) {
    %c0_i32 = arith.constant 0 : i32
    %c0_i32_0 = arith.constant 0 : i32
    %c0_i32_1 = arith.constant 0 : i32
    return %arg0, %c0_i32, %c0_i32_0 : i32, i32, i32
  }
  func.func @transform_2(%arg0: i32) -> (i32, i32) {
    %c0_i32 = arith.constant 0 : i32
    %c0_i32_0 = arith.constant 0 : i32
    %c0_i32_1 = arith.constant 0 : i32
    return %c0_i32, %c0_i32_0 : i32, i32
  }
  func.func @transform_3(%arg0: i32) -> (i32, i32) {
    %c0_i32 = arith.constant 0 : i32
    %c0_i32_0 = arith.constant 0 : i32
    %c0_i32_1 = arith.constant 0 : i32
    return %c0_i32, %c0_i32_0 : i32, i32
  }
  func.func @transform_4(%arg0: i32) -> (i32, i32) {
    %c0_i32 = arith.constant 0 : i32
    %c0_i32_0 = arith.constant 0 : i32
    %c0_i32_1 = arith.constant 0 : i32
    return %c0_i32, %c0_i32_0 : i32, i32
  }
  func.func @transform_5(%arg0: i32) -> (i32, i32) {
    %c0_i32 = arith.constant 0 : i32
    %c0_i32_0 = arith.constant 0 : i32
    %c0_i32_1 = arith.constant 0 : i32
    return %c0_i32, %c0_i32_0 : i32, i32
  }
  func.func @transform_6(%arg0: i32) -> (i32, i32) {
    %c0_i32 = arith.constant 0 : i32
    %c0_i32_0 = arith.constant 0 : i32
    %c0_i32_1 = arith.constant 0 : i32
    return %c0_i32, %c0_i32_0 : i32, i32
  }
  func.func @transform_7(%arg0: i32) -> (i32, i32) {
    %c0_i32 = arith.constant 0 : i32
    %c0_i32_0 = arith.constant 0 : i32
    %c0_i32_1 = arith.constant 0 : i32
    return %c0_i32, %c0_i32_0 : i32, i32
  }
  func.func @transform_8(%arg0: i32) -> (i32, i32, i32) {
    %c0_i32 = arith.constant 0 : i32
    %c0_i32_0 = arith.constant 0 : i32
    %c0_i32_1 = arith.constant 0 : i32
    return %arg0, %c0_i32, %c0_i32_0 : i32, i32, i32
  }
  func.func @transform_9(%arg0: i32) -> (i32, i32, i32) {
    %c0_i32 = arith.constant 0 : i32
    %c0_i32_0 = arith.constant 0 : i32
    %c0_i32_1 = arith.constant 0 : i32
    return %arg0, %c0_i32, %c0_i32_0 : i32, i32, i32
  }
}

</mosaic_0001>

<llo_original>
// kernel: tpu_custom_call.1
$region0: #{tpu_custom_call.1}
  #allocation0 [shape = 'u32[]', space=smem, size = 0x4, offset = 0x4, fixed_abs, tag = 'smem constant byte address 0x4 - core index']
  #allocation1 [shape = 'u32[72,128]{1,0:T(1,128)}', space=vmem, size = 0x9000, scoped, tag = 'internal scratch']
  %s0 = inlined_call_operand.hbm [shape: f32[2,8,16], index: 0, kind: input, shape index: {}]
  %s1 = inlined_call_operand.hbm [shape: f32[2,16,24], index: 1, kind: input, shape index: {}]
  %s2 = inlined_call_operand.hbm [shape: bf16[16,32], index: 2, kind: input, shape index: {}]
  %s3 = inlined_call_operand.vmem [shape: f32[1,32], index: 3, kind: input, shape index: {}]
  %s4 = inlined_call_operand.hbm [shape: bf16[24,32], index: 4, kind: input, shape index: {}]
  %s5 = inlined_call_operand.vmem [shape: f32[1,32], index: 5, kind: input, shape index: {}]
  %s6 = inlined_call_operand.hbm [shape: bf16[24,32], index: 6, kind: input, shape index: {}]
  %s7 = inlined_call_operand.vmem [shape: f32[1,32], index: 7, kind: input, shape index: {}]
  %s8 = inlined_call_operand.vmem [shape: s8[2,8,16], index: 8, kind: input, shape index: {}]
  %s9 = inlined_call_operand.hbm [shape: f32[2,8,32], index: 9, kind: output, shape index: {}]
  %s10 = sld [smem:[#allocation0]]
  $region66: #{tpu_custom_call.1} parent=0
    _
  %s12 = ssub.s32 1, %s10
  %s13 = scalar_select 0, %s12, %s10
  $region1: #{tpu_custom_call.1} parent=0
    #allocation2 [shape = 'u8[8192]{0}', space=vmem, size = 0x2000, scoped, tag = 'input window, operand 0, single buffered']
    #allocation3 [shape = 's32[1]{0}', space=sflag, size = 0x4, scoped, tag = 'scoped memory for tpu_custom_call.1']
    #allocation4 [shape = 's32[1]{0}', space=sflag, size = 0x4, scoped, tag = 'scoped memory for tpu_custom_call.1']
    #allocation5 [shape = 'u8[16384]{0}', space=vmem, size = 0x4000, scoped, tag = 'input window, operand 1, single buffered']
    #allocation6 [shape = 's32[1]{0}', space=sflag, size = 0x4, scoped, tag = 'scoped memory for tpu_custom_call.1']
    #allocation7 [shape = 'u8[4096]{0}', space=vmem, size = 0x1000, scoped, tag = 'input window, operand 2, single buffered']
    #allocation8 [shape = 'u8[6144]{0}', space=vmem, size = 0x1800, scoped, tag = 'input window, operand 4, single buffered']
    #allocation9 [shape = 's32[1]{0}', space=sflag, size = 0x4, scoped, tag = 'scoped memory for tpu_custom_call.1']
    #allocation10 [shape = 'u8[6144]{0}', space=vmem, size = 0x1800, scoped, tag = 'input window, operand 6, single buffered']
    #allocation11 [shape = 'u8[8192]{0}', space=vmem, size = 0x2000, scoped, tag = 'output window, operand 0, single buffered']
    %14 = vsyncpa [#allocation3], 0
    %15 = vsyncpa [#allocation6], 0
    %16 = vsyncpa [#allocation9], 0
    %17 = vsyncpa [#allocation4], 0
    // Predicated region
    $region2: #{tpu_custom_call.1} parent=1 // pred_check
      _
    $region3: #{tpu_custom_call.1} parent=1 // pred_check_branch
      %19 = sbr.rel (0) target = $region5
    $region4: #{tpu_custom_call.1} parent=1 // pred_region
      %21 = vsyncadd [#allocation3], 0
      %s22 = sshll.u32 %s0, 4
      %s23 = int_to_ptr.hbm [resolvable:$true] %s22
      %s24 = sshll.u32 [#allocation2], 4
      %s25 = int_to_ptr.vmem [resolvable:$true] %s24
      %30 = dma.hbm_to_vmem [thread:$0]  %s23, 256, %s25, [#allocation3], 128, 128, 8
    $region5: #{tpu_custom_call.1} parent=1 // pred_fallthru
      _
    // Predicated region
    $region6: #{tpu_custom_call.1} parent=1 // pred_check
      _
    $region7: #{tpu_custom_call.1} parent=1 // pred_check_branch
      %32 = sbr.rel (0) target = $region9
    $region8: #{tpu_custom_call.1} parent=1 // pred_region
      %34 = vsyncadd [#allocation6], 0
      %s35 = sshll.u32 %s1, 4
      %s36 = int_to_ptr.hbm [resolvable:$true] %s35
      %s37 = sshll.u32 [#allocation5], 4
      %s38 = int_to_ptr.vmem [resolvable:$true] %s37
      %43 = dma.hbm_to_vmem [thread:$0]  %s36, 512, %s38, [#allocation6], 128, 128, 8
    $region9: #{tpu_custom_call.1} parent=1 // pred_fallthru
      _
    // Predicated region
    $region10: #{tpu_custom_call.1} parent=1 // pred_check
      _
    $region11: #{tpu_custom_call.1} parent=1 // pred_check_branch
      %45 = sbr.rel (0) target = $region13
    $region12: #{tpu_custom_call.1} parent=1 // pred_region
      %47 = vsyncadd [#allocation6], 0
      %s48 = sshll.u32 %s2, 4
      %s49 = int_to_ptr.hbm [resolvable:$true] %s48
      %s50 = sshll.u32 [#allocation7], 4
      %s51 = int_to_ptr.vmem [resolvable:$true] %s50
      %56 = dma.hbm_to_vmem [thread:$0]  %s49, 128, %s51, [#allocation6], 64, 64, 4
    $region13: #{tpu_custom_call.1} parent=1 // pred_fallthru
      _
    // Predicated region
    $region14: #{tpu_custom_call.1} parent=1 // pred_check
      _
    $region15: #{tpu_custom_call.1} parent=1 // pred_check_branch
      %58 = sbr.rel (0) target = $region17
    $region16: #{tpu_custom_call.1} parent=1 // pred_region
      _
    $region17: #{tpu_custom_call.1} parent=1 // pred_fallthru
      _
    // Predicated region
    $region18: #{tpu_custom_call.1} parent=1 // pred_check
      _
    $region19: #{tpu_custom_call.1} parent=1 // pred_check_branch
      %60 = sbr.rel (0) target = $region21
    $region20: #{tpu_custom_call.1} parent=1 // pred_region
      %62 = vsyncadd [#allocation9], 0
      %s63 = sshll.u32 %s4, 4
      %s64 = int_to_ptr.hbm [resolvable:$true] %s63
      %s65 = sshll.u32 [#allocation8], 4
      %s66 = int_to_ptr.vmem [resolvable:$true] %s65
      %71 = dma.hbm_to_vmem [thread:$0]  %s64, 192, %s66, [#allocation9], 64, 64, 4
    $region21: #{tpu_custom_call.1} parent=1 // pred_fallthru
      _
    // Predicated region
    $region22: #{tpu_custom_call.1} parent=1 // pred_check
      _
    $region23: #{tpu_custom_call.1} parent=1 // pred_check_branch
      %73 = sbr.rel (0) target = $region25
    $region24: #{tpu_custom_call.1} parent=1 // pred_region
      _
    $region25: #{tpu_custom_call.1} parent=1 // pred_fallthru
      _
    // Predicated region
    $region26: #{tpu_custom_call.1} parent=1 // pred_check
      _
    $region27: #{tpu_custom_call.1} parent=1 // pred_check_branch
      %75 = sbr.rel (0) target = $region29
    $region28: #{tpu_custom_call.1} parent=1 // pred_region
      %77 = vsyncadd [#allocation9], 0
      %s78 = sshll.u32 %s6, 4
      %s79 = int_to_ptr.hbm [resolvable:$true] %s78
      %s80 = sshll.u32 [#allocation10], 4
      %s81 = int_to_ptr.vmem [resolvable:$true] %s80
      %86 = dma.hbm_to_vmem [thread:$0]  %s79, 192, %s81, [#allocation9], 64, 64, 4
    $region29: #{tpu_custom_call.1} parent=1 // pred_fallthru
      _
    // Predicated region
    $region30: #{tpu_custom_call.1} parent=1 // pred_check
      _
    $region31: #{tpu_custom_call.1} parent=1 // pred_check_branch
      %88 = sbr.rel (0) target = $region33
    $region32: #{tpu_custom_call.1} parent=1 // pred_region
      _
    $region33: #{tpu_custom_call.1} parent=1 // pred_fallthru
      _
    // Predicated region
    $region34: #{tpu_custom_call.1} parent=1 // pred_check
      _
    $region35: #{tpu_custom_call.1} parent=1 // pred_check_branch
      %90 = sbr.rel (0) target = $region37
    $region36: #{tpu_custom_call.1} parent=1 // pred_region
      _
    $region37: #{tpu_custom_call.1} parent=1 // pred_fallthru
      _
    // Predicated region
    $region38: #{tpu_custom_call.1} parent=1 // pred_check
      _
    $region39: #{tpu_custom_call.1} parent=1 // pred_check_branch
      %92 = sbr.rel (0) target = $region41
    $region40: #{tpu_custom_call.1} parent=1 // pred_region
      %94 = dma.done [#allocation3], 256
    $region41: #{tpu_custom_call.1} parent=1 // pred_fallthru
      _
    // Predicated region
    $region42: #{tpu_custom_call.1} parent=1 // pred_check
      _
    $region43: #{tpu_custom_call.1} parent=1 // pred_check_branch
      %96 = sbr.rel (0) target = $region45
    $region44: #{tpu_custom_call.1} parent=1 // pred_region
      %98 = dma.done [#allocation6], 512
    $region45: #{tpu_custom_call.1} parent=1 // pred_fallthru
      _
    // Predicated region
    $region46: #{tpu_custom_call.1} parent=1 // pred_check
      _
    $region47: #{tpu_custom_call.1} parent=1 // pred_check_branch
      %100 = sbr.rel (0) target = $region49
    $region48: #{tpu_custom_call.1} parent=1 // pred_region
      %102 = dma.done [#allocation6], 128
    $region49: #{tpu_custom_call.1} parent=1 // pred_fallthru
      _
    // Predicated region
    $region50: #{tpu_custom_call.1} parent=1 // pred_check
      _
    $region51: #{tpu_custom_call.1} parent=1 // pred_check_branch
      %104 = sbr.rel (0) target = $region53
    $region52: #{tpu_custom_call.1} parent=1 // pred_region
      %106 = dma.done [#allocation9], 192
    $region53: #{tpu_custom_call.1} parent=1 // pred_fallthru
      _
    // Predicated region
    $region54: #{tpu_custom_call.1} parent=1 // pred_check
      _
    $region55: #{tpu_custom_call.1} parent=1 // pred_check_branch
      %108 = sbr.rel (0) target = $region57
    $region56: #{tpu_custom_call.1} parent=1 // pred_region
      %110 = dma.done [#allocation9], 192
    $region57: #{tpu_custom_call.1} parent=1 // pred_fallthru
      _
    %v112 = vld [vmem:[#allocation2] sm:$0xff]
    %v113 = vld [vmem:[#allocation2 + $0x8] sm:$0xff]
    %v114 = vpack.c.bf16 %v113, %v112
    %v115 = vld [vmem:[#allocation5] sm:$0xff]
    %v116 = vld [vmem:[#allocation5 + $0x8] sm:$0xff]
    %v117 = vld [vmem:[#allocation5 + $0x10] sm:$0xff]
    %v118 = vld [vmem:[#allocation5 + $0x18] sm:$0xff]
    %v119 = vpack.c.bf16 %v116, %v115
    %v120 = vpack.c.bf16 %v118, %v117
    %v121 = vld [vmem:[#allocation7] sm:$0xf]
    %v122 = vld [vmem:[#allocation7 + $0x4] sm:$0xf]
    %v123 = vld [vmem:[%s3] sm:$0x1]
    %v125 = vperm.slane %v123, 0
    %v129 = vunpack.c.l.b16 %v121
    %v130 = vunpack.c.l.b16 %v122
    %v131 = vpack.c.b16 %v130, %v129
    %vm133 = vcmask 130048
    %v135 = vsel %vm133, %v114, 0
    %137 = vmatpush.bf16.msra.mxu0 0
    %138 = vmatpush.bf16.msra.mxu0 0
    %139 = vmatpush.bf16.msra.mxu0 0
    %140 = vmatpush.bf16.msra.mxu0 0
    %141 = vmatpush.bf16.msra.mxu0 0
    %142 = vmatpush.bf16.msra.mxu0 0
    %143 = vmatpush.bf16.msra.mxu0 0
    %144 = vmatpush.bf16.msra.mxu0 %v131
    %145 = vmatmul.bf16.gmra.mxu0 %v135
    %v146 = vpop.f32.mrf.mxu0
    %v147 = vadd.f32 %v125, %v146
    %v148 = vpop.f32.mrf.mxu0
    %v149 = vadd.f32 %v125, %v148
    %150 = vdwg.mxu0
    %v151 = vld [vmem:[#allocation8] sm:$0xf]
    %v152 = vld [vmem:[#allocation8 + $0x4] sm:$0xf]
    %v153 = vld [vmem:[#allocation8 + $0x8] sm:$0xf]
    %v154 = vld [vmem:[%s5] sm:$0x1]
    %v156 = vperm.slane %v154, 0
    %v161 = vunpack.c.l.b16 %v151
    %v162 = vunpack.c.l.b16 %v152
    %v163 = vunpack.c.l.b16 %v153
    %v164 = vpack.c.b16 %v162, %v161
    %v165 = vpack.c.b16 %v163, %v163
    %vm167 = vcmask 195584
    %v169 = vsel %vm167, %v119, 0
    %v172 = vsel %vm167, %v120, 0
    %vm174 = vcmask 1043456
    %v176 = vsel %vm174, %v165, 0
    %178 = vmatpush.bf16.msra.mxu0 0
    %179 = vmatpush.bf16.msra.mxu0 0
    %180 = vmatpush.bf16.msra.mxu0 0
    %181 = vmatpush.bf16.msra.mxu0 0
    %182 = vmatpush.bf16.msra.mxu0 0
    %183 = vmatpush.bf16.msra.mxu0 0
    %184 = vmatpush.bf16.msra.mxu0 %v176
    %185 = vmatpush.bf16.msra.mxu0 %v164
    %186 = vmatmul.bf16.gmra.mxu0 %v169
    %v187 = vpop.f32.mrf.mxu0
    %v188 = vadd.f32 %v156, %v187
    %v189 = vpop.f32.mrf.mxu0
    %v190 = vadd.f32 %v156, %v189
    %191 = vmatmul.bf16.gmra.mxu0 %v172
    %v192 = vpop.f32.mrf.mxu0
    %v193 = vadd.f32 %v156, %v192
    %v194 = vpop.f32.mrf.mxu0
    %v195 = vadd.f32 %v156, %v194
    %196 = vdwg.mxu0
    %v197 = vld [vmem:[#allocation10] sm:$0xf]
    %v198 = vld [vmem:[#allocation10 + $0x4] sm:$0xf]
    %v199 = vld [vmem:[#allocation10 + $0x8] sm:$0xf]
    %v200 = vld [vmem:[%s7] sm:$0x1]
    %v202 = vperm.slane %v200, 0
    %v207 = vunpack.c.l.b16 %v197
    %v208 = vunpack.c.l.b16 %v198
    %v209 = vunpack.c.l.b16 %v199
    %v210 = vpack.c.b16 %v208, %v207
    %v211 = vpack.c.b16 %v209, %v209
    %v214 = vsel %vm174, %v211, 0
    %216 = vmatpush.bf16.msra.mxu0 0
    %217 = vmatpush.bf16.msra.mxu0 0
    %218 = vmatpush.bf16.msra.mxu0 0
    %219 = vmatpush.bf16.msra.mxu0 0
    %220 = vmatpush.bf16.msra.mxu0 0
    %221 = vmatpush.bf16.msra.mxu0 0
    %222 = vmatpush.bf16.msra.mxu0 %v214
    %223 = vmatpush.bf16.msra.mxu0 %v210
    %224 = vmatmul.bf16.gmra.mxu0 %v169
    %v225 = vpop.f32.mrf.mxu0
    %v226 = vadd.f32 %v202, %v225
    %v227 = vpop.f32.mrf.mxu0
    %v228 = vadd.f32 %v202, %v227
    %229 = vmatmul.bf16.gmra.mxu0 %v172
    %v230 = vpop.f32.mrf.mxu0
    %v231 = vadd.f32 %v202, %v230
    %v232 = vpop.f32.mrf.mxu0
    %v233 = vadd.f32 %v202, %v232
    %234 = vdwg.mxu0
    %237 = vrot.lane.b32.xlu0 %v147, 112
    %v238 = vpop.permute.xlu0 %237
    %239 = vrot.lane.b32.xlu0 %v149, 112
    %v240 = vpop.permute.xlu0 %239
    %v243 = vpack.c.bf16 %v147, %v147
    %v244 = vpack.c.bf16 %v149, %v149
    %v245 = vpack.c.bf16 %v238, %v238
    %v246 = vpack.c.bf16 %v240, %v240
    %251 = vrot.lane.b32.xlu0 %v188, 112
    %v252 = vpop.permute.xlu0 %251
    %253 = vrot.lane.b32.xlu0 %v190, 112
    %v254 = vpop.permute.xlu0 %253
    %255 = vrot.lane.b32.xlu0 %v193, 112
    %v256 = vpop.permute.xlu0 %255
    %257 = vrot.lane.b32.xlu0 %v195, 112
    %v258 = vpop.permute.xlu0 %257
    %v263 = vpack.c.bf16 %v188, %v188
    %v264 = vpack.c.bf16 %v190, %v190
    %v265 = vpack.c.bf16 %v193, %v193
    %v266 = vpack.c.bf16 %v195, %v195
    %v267 = vpack.c.bf16 %v252, %v252
    %v268 = vpack.c.bf16 %v254, %v254
    %v269 = vpack.c.bf16 %v256, %v256
    %v270 = vpack.c.bf16 %v258, %v258
    %275 = vrot.lane.b32.xlu0 %v226, 112
    %v276 = vpop.permute.xlu0 %275
    %277 = vrot.lane.b32.xlu0 %v228, 112
    %v278 = vpop.permute.xlu0 %277
    %279 = vrot.lane.b32.xlu0 %v231, 112
    %v280 = vpop.permute.xlu0 %279
    %281 = vrot.lane.b32.xlu0 %v233, 112
    %v282 = vpop.permute.xlu0 %281
    %v287 = vpack.c.bf16 %v226, %v226
    %v288 = vpack.c.bf16 %v228, %v228
    %v289 = vpack.c.bf16 %v231, %v231
    %v290 = vpack.c.bf16 %v233, %v233
    %v291 = vpack.c.bf16 %v276, %v276
    %v292 = vpack.c.bf16 %v278, %v278
    %v293 = vpack.c.bf16 %v280, %v280
    %v294 = vpack.c.bf16 %v282, %v282
    %v297 = vunpack.c.l.b16 %v263
    %v298 = vunpack.c.l.b16 %v264
    %v299 = vpack.c.b16 %v298, %v297
    %v301 = vsel %vm133, %v243, 0
    %v304 = vsel %vm133, %v299, 0
    %306 = vmatpush.bf16.xpose.msra.mxu0 0
    %307 = vmatpush.bf16.xpose.msra.mxu0 0
    %308 = vmatpush.bf16.xpose.msra.mxu0 0
    %309 = vmatpush.bf16.xpose.msra.mxu0 0
    %310 = vmatpush.bf16.xpose.msra.mxu0 0
    %311 = vmatpush.bf16.xpose.msra.mxu0 0
    %312 = vmatpush.bf16.xpose.msra.mxu0 0
    %313 = vmatpush.bf16.xpose.msra.mxu0 %v304
    %314 = vmatmul.bf16.gmra.mxu0 %v301
    %v315 = vpop.f32.mrf.mxu0
    %v316 = vadd.f32 0.0, %v315
    %v317 = vpop.f32.mrf.mxu0
    %318 = vdwg.mxu0
    %v321 = vunpack.c.l.b16 %v265
    %v322 = vunpack.c.l.b16 %v266
    %v323 = vpack.c.b16 %v322, %v321
    %v325 = vsel %vm133, %v244, 0
    %v328 = vsel %vm133, %v323, 0
    %330 = vmatpush.bf16.xpose.msra.mxu0 0
    %331 = vmatpush.bf16.xpose.msra.mxu0 0
    %332 = vmatpush.bf16.xpose.msra.mxu0 0
    %333 = vmatpush.bf16.xpose.msra.mxu0 0
    %334 = vmatpush.bf16.xpose.msra.mxu0 0
    %335 = vmatpush.bf16.xpose.msra.mxu0 0
    %336 = vmatpush.bf16.xpose.msra.mxu0 0
    %337 = vmatpush.bf16.xpose.msra.mxu0 %v328
    %338 = vmatmul.bf16.gmra.mxu0 %v325
    %v339 = vpop.f32.mrf.mxu0
    %v340 = vadd.f32 0.0, %v339
    %v341 = vpop.f32.mrf.mxu0
    %342 = vdwg.mxu0
    %v345 = vunpack.c.l.b16 %v267
    %v346 = vunpack.c.l.b16 %v268
    %v347 = vpack.c.b16 %v346, %v345
    %v349 = vsel %vm133, %v245, 0
    %v352 = vsel %vm133, %v347, 0
    %354 = vmatpush.bf16.xpose.msra.mxu0 0
    %355 = vmatpush.bf16.xpose.msra.mxu0 0
    %356 = vmatpush.bf16.xpose.msra.mxu0 0
    %357 = vmatpush.bf16.xpose.msra.mxu0 0
    %358 = vmatpush.bf16.xpose.msra.mxu0 0
    %359 = vmatpush.bf16.xpose.msra.mxu0 0
    %360 = vmatpush.bf16.xpose.msra.mxu0 0
    %361 = vmatpush.bf16.xpose.msra.mxu0 %v352
    %362 = vmatmul.bf16.gmra.mxu0 %v349
    %v363 = vpop.f32.mrf.mxu0
    %v364 = vadd.f32 0.0, %v363
    %v365 = vpop.f32.mrf.mxu0
    %366 = vdwg.mxu0
    %v369 = vunpack.c.l.b16 %v269
    %v370 = vunpack.c.l.b16 %v270
    %v371 = vpack.c.b16 %v370, %v369
    %v373 = vsel %vm133, %v246, 0
    %v376 = vsel %vm133, %v371, 0
    %378 = vmatpush.bf16.xpose.msra.mxu0 0
    %379 = vmatpush.bf16.xpose.msra.mxu0 0
    %380 = vmatpush.bf16.xpose.msra.mxu0 0
    %381 = vmatpush.bf16.xpose.msra.mxu0 0
    %382 = vmatpush.bf16.xpose.msra.mxu0 0
    %383 = vmatpush.bf16.xpose.msra.mxu0 0
    %384 = vmatpush.bf16.xpose.msra.mxu0 0
    %385 = vmatpush.bf16.xpose.msra.mxu0 %v376
    %386 = vmatmul.bf16.gmra.mxu0 %v373
    %v387 = vpop.f32.mrf.mxu0
    %v388 = vadd.f32 0.0, %v387
    %v389 = vpop.f32.mrf.mxu0
    %390 = vdwg.mxu0
    %v391 = vld [vmem:[%s8] sm:$0x3]
    %v392 = vld [vmem:[%s8 + $0x2] sm:$0x3]
    %v393 = vunpack.c.0.s8 %v391
    %v394 = vunpack.c.0.s8 %v392
    %v395 = vcvt.s32.f32 %v393
    %v396 = vcvt.s32.f32 %v394
    %v397 = vsub.f32 1.0, %v395
    %v398 = vsub.f32 1.0, %v396
    %v399 = vmul.f32 %v397, -10000.0
    %v400 = vmul.f32 %v398, -10000.0
    %v401 = vadd.f32 %v316, %v399
    %v402 = vadd.f32 %v340, %v400
    %v403 = vadd.f32 %v364, %v399
    %v404 = vadd.f32 %v388, %v400
    %v405 = vsel %vm133, %v401, -inf
    %406 = vmax.xlane.f32.xlu0 %v405
    %v407 = vpop.xlane.xlu0 %406
    %v408 = vsel %vm133, %v402, -inf
    %409 = vmax.xlane.f32.xlu0 %v408
    %v410 = vpop.xlane.xlu0 %409
    %v411 = vsel %vm133, %v403, -inf
    %412 = vmax.xlane.f32.xlu0 %v411
    %v413 = vpop.xlane.xlu0 %412
    %v414 = vsel %vm133, %v404, -inf
    %415 = vmax.xlane.f32.xlu0 %v414
    %v416 = vpop.xlane.xlu0 %415
    %v417 = vsub.f32 %v401, %v407
    %v418 = vsub.f32 %v402, %v410
    %v419 = vsub.f32 %v403, %v413
    %v420 = vsub.f32 %v404, %v416
    %v421 = vmul.f32 %v417, 1.442695
    %v422 = vpow.pop %v421
    %v423 = vmul.f32 %v418, 1.442695
    %v424 = vpow.pop %v423
    %v425 = vmul.f32 %v419, 1.442695
    %v426 = vpow.pop %v425
    %v427 = vmul.f32 %v420, 1.442695
    %v428 = vpow.pop %v427
    %v429 = vsel %vm133, %v422, 0.0
    %430 = vadd.xlane.f32.xlu0 %v429
    %v431 = vpop.xlane.xlu0 %430
    %v432 = vsel %vm133, %v424, 0.0
    %433 = vadd.xlane.f32.xlu0 %v432
    %v434 = vpop.xlane.xlu0 %433
    %v435 = vsel %vm133, %v426, 0.0
    %436 = vadd.xlane.f32.xlu0 %v435
    %v437 = vpop.xlane.xlu0 %436
    %v438 = vsel %vm133, %v428, 0.0
    %439 = vadd.xlane.f32.xlu0 %v438
    %v440 = vpop.xlane.xlu0 %439
    %v441 = vrcp.pop %v431
    %v442 = vmul.f32 %v431, %v441
    %v443 = vsub.f32 1.0, %v442
    %v444 = vmul.f32 %v441, %v443
    %v445 = vadd.f32 %v441, %v444
    %vm446 = vweird.f32 %v431
    %vm447 = vweird.f32 %v441
    %vm448 = vmor %vm446, %vm447
    %v449 = vsel %vm448, %v441, %v445
    %v450 = vand.u32 2147483647, %v431
    %vm451 = vcmp.eq.f32.partialorder %v450, 8.507059e+37
    %v452 = vand.u32 %v431, 2147483648
    %v453 = vor.u32 1.1754944e-38, %v452
    %v454 = vsel %vm451, %v453, %v449
    %v455 = vmul.f32 %v422, %v454
    %v456 = vrcp.pop %v434
    %v457 = vmul.f32 %v434, %v456
    %v458 = vsub.f32 1.0, %v457
    %v459 = vmul.f32 %v456, %v458
    %v460 = vadd.f32 %v456, %v459
    %vm461 = vweird.f32 %v434
    %vm462 = vweird.f32 %v456
    %vm463 = vmor %vm461, %vm462
    %v464 = vsel %vm463, %v456, %v460
    %v465 = vand.u32 2147483647, %v434
    %vm466 = vcmp.eq.f32.partialorder %v465, 8.507059e+37
    %v467 = vand.u32 %v434, 2147483648
    %v468 = vor.u32 1.1754944e-38, %v467
    %v469 = vsel %vm466, %v468, %v464
    %v470 = vmul.f32 %v424, %v469
    %v471 = vrcp.pop %v437
    %v472 = vmul.f32 %v437, %v471
    %v473 = vsub.f32 1.0, %v472
    %v474 = vmul.f32 %v471, %v473
    %v475 = vadd.f32 %v471, %v474
    %vm476 = vweird.f32 %v437
    %vm477 = vweird.f32 %v471
    %vm478 = vmor %vm476, %vm477
    %v479 = vsel %vm478, %v471, %v475
    %v480 = vand.u32 2147483647, %v437
    %vm481 = vcmp.eq.f32.partialorder %v480, 8.507059e+37
    %v482 = vand.u32 %v437, 2147483648
    %v483 = vor.u32 1.1754944e-38, %v482
    %v484 = vsel %vm481, %v483, %v479
    %v485 = vmul.f32 %v426, %v484
    %v486 = vrcp.pop %v440
    %v487 = vmul.f32 %v440, %v486
    %v488 = vsub.f32 1.0, %v487
    %v489 = vmul.f32 %v486, %v488
    %v490 = vadd.f32 %v486, %v489
    %vm491 = vweird.f32 %v440
    %vm492 = vweird.f32 %v486
    %vm493 = vmor %vm491, %vm492
    %v494 = vsel %vm493, %v486, %v490
    %v495 = vand.u32 2147483647, %v440
    %vm496 = vcmp.eq.f32.partialorder %v495, 8.507059e+37
    %v497 = vand.u32 %v440, 2147483648
    %v498 = vor.u32 1.1754944e-38, %v497
    %v499 = vsel %vm496, %v498, %v494
    %v500 = vmul.f32 %v428, %v499
    %v501 = vpack.c.bf16 %v455, %v455
    %v502 = vpack.c.bf16 %v470, %v470
    %v503 = vpack.c.bf16 %v485, %v485
    %v504 = vpack.c.bf16 %v500, %v500
    %v507 = vunpack.c.l.b16 %v287
    %v508 = vunpack.c.l.b16 %v288
    %v509 = vpack.c.b16 %v508, %v507
    %v512 = vsel %vm133, %v501, 0
    %514 = vmatpush.bf16.msra.mxu0 0
    %515 = vmatpush.bf16.msra.mxu0 0
    %516 = vmatpush.bf16.msra.mxu0 0
    %517 = vmatpush.bf16.msra.mxu0 0
    %518 = vmatpush.bf16.msra.mxu0 0
    %519 = vmatpush.bf16.msra.mxu0 0
    %520 = vmatpush.bf16.msra.mxu0 0
    %521 = vmatpush.bf16.msra.mxu0 %v509
    %522 = vmatmul.bf16.gmra.mxu0 %v512
    %v523 = vpop.f32.mrf.mxu0
    %v524 = vadd.f32 0.0, %v523
    %v525 = vpop.f32.mrf.mxu0
    %526 = vdwg.mxu0
    %v529 = vunpack.c.l.b16 %v289
    %v530 = vunpack.c.l.b16 %v290
    %v531 = vpack.c.b16 %v530, %v529
    %v534 = vsel %vm133, %v502, 0
    %536 = vmatpush.bf16.msra.mxu0 0
    %537 = vmatpush.bf16.msra.mxu0 0
    %538 = vmatpush.bf16.msra.mxu0 0
    %539 = vmatpush.bf16.msra.mxu0 0
    %540 = vmatpush.bf16.msra.mxu0 0
    %541 = vmatpush.bf16.msra.mxu0 0
    %542 = vmatpush.bf16.msra.mxu0 0
    %543 = vmatpush.bf16.msra.mxu0 %v531
    %544 = vmatmul.bf16.gmra.mxu0 %v534
    %v545 = vpop.f32.mrf.mxu0
    %v546 = vadd.f32 0.0, %v545
    %v547 = vpop.f32.mrf.mxu0
    %548 = vdwg.mxu0
    %v551 = vunpack.c.l.b16 %v291
    %v552 = vunpack.c.l.b16 %v292
    %v553 = vpack.c.b16 %v552, %v551
    %v556 = vsel %vm133, %v503, 0
    %558 = vmatpush.bf16.msra.mxu0 0
    %559 = vmatpush.bf16.msra.mxu0 0
    %560 = vmatpush.bf16.msra.mxu0 0
    %561 = vmatpush.bf16.msra.mxu0 0
    %562 = vmatpush.bf16.msra.mxu0 0
    %563 = vmatpush.bf16.msra.mxu0 0
    %564 = vmatpush.bf16.msra.mxu0 0
    %565 = vmatpush.bf16.msra.mxu0 %v553
    %566 = vmatmul.bf16.gmra.mxu0 %v556
    %v567 = vpop.f32.mrf.mxu0
    %v568 = vadd.f32 0.0, %v567
    %v569 = vpop.f32.mrf.mxu0
    %570 = vdwg.mxu0
    %v573 = vunpack.c.l.b16 %v293
    %v574 = vunpack.c.l.b16 %v294
    %v575 = vpack.c.b16 %v574, %v573
    %v578 = vsel %vm133, %v504, 0
    %580 = vmatpush.bf16.msra.mxu0 0
    %581 = vmatpush.bf16.msra.mxu0 0
    %582 = vmatpush.bf16.msra.mxu0 0
    %583 = vmatpush.bf16.msra.mxu0 0
    %584 = vmatpush.bf16.msra.mxu0 0
    %585 = vmatpush.bf16.msra.mxu0 0
    %586 = vmatpush.bf16.msra.mxu0 0
    %587 = vmatpush.bf16.msra.mxu0 %v575
    %588 = vmatmul.bf16.gmra.mxu0 %v578
    %v589 = vpop.f32.mrf.mxu0
    %v590 = vadd.f32 0.0, %v589
    %v591 = vpop.f32.mrf.mxu0
    %592 = vdwg.mxu0
    %593 = vst.msk [vmem:[#allocation11] sm:$0xff] %vm133, %v524
    %594 = vst.msk [vmem:[#allocation11 + $0x8] sm:$0xff] %vm133, %v546
    %597 = vrot.lane.b32.xlu0 %v568, 16
    %v598 = vpop.permute.xlu0 %597
    %599 = vrot.lane.b32.xlu0 %v590, 16
    %v600 = vpop.permute.xlu0 %599
    %vm603 = vcmask 261248
    %604 = vst.msk [vmem:[#allocation11] sm:$0xff] %vm603, %v598
    %605 = vst.msk [vmem:[#allocation11 + $0x8] sm:$0xff] %vm603, %v600
    // Predicated region
    $region58: #{tpu_custom_call.1} parent=1 // pred_check
      _
    $region59: #{tpu_custom_call.1} parent=1 // pred_check_branch
      %607 = sbr.rel (0) target = $region61
    $region60: #{tpu_custom_call.1} parent=1 // pred_region
      %609 = vsyncadd [#allocation4], 0
      %s610 = sshll.u32 [#allocation11], 4
      %s611 = int_to_ptr.vmem [resolvable:$true] %s610
      %s612 = sshll.u32 %s9, 4
      %s613 = int_to_ptr.hbm [resolvable:$true] %s612
      %618 = dma.vmem_to_hbm [thread:$0]  %s611, 256, %s613, [#allocation4], 128, 128, 8
    $region61: #{tpu_custom_call.1} parent=1 // pred_fallthru
      _
    // Predicated region
    $region62: #{tpu_custom_call.1} parent=1 // pred_check
      _
    $region63: #{tpu_custom_call.1} parent=1 // pred_check_branch
      %620 = sbr.rel (0) target = $region65
    $region64: #{tpu_custom_call.1} parent=1 // pred_region
      %622 = dma.done [#allocation4], 256
    $region65: #{tpu_custom_call.1} parent=1 // pred_fallthru
      _
    %623 = vsyncpa [#allocation3], 1
    %624 = vsyncpa [#allocation6], 1
    %625 = vsyncpa [#allocation9], 1
    %626 = vsyncpa [#allocation4], 1

</llo_original>
